<compile_context>
chip_gen: v6e
topology: v6e:2x2x1
jax: 0.10.0
libtpu: 0.0.40
codegen_flags: <defaults>
</compile_context>

<pallas_src>
import numpy as np
import jax
import jax.numpy as jnp
from jax import lax
from jax.experimental import pallas as pl
from jax.experimental.pallas import tpu as pltpu

NUM_SAMPLES = 128   # num_samples (lane axis)
NUM_COEFFS = 8      # num_coeffs
NUM_PARAMS = 2      # num_params (dilation, translation)
TM_DEFAULT = 4096   # rows of flattened x per grid step (2 MiB f32 per step)


def fun_system(params):
    """Deterministic function system: Gaussian-windowed cosines; returns (phi, dphi)."""
    def build_phi(p):
        a, b = p[0], p[1]
        t = jnp.linspace(-1.0, 1.0, NUM_SAMPLES, dtype=jnp.float32)
        u = a * (t - b)
        k = jnp.arange(NUM_COEFFS, dtype=jnp.float32)[:, None]
        return jnp.cos(jnp.pi * k * u[None, :]) * jnp.exp(-(u[None, :] ** 2))

    phi = build_phi(params)                                          # (K, N)
    dphi = jnp.transpose(jax.jacfwd(build_phi)(params), (2, 0, 1))   # (P, K, N)
    return phi, dphi


def _device_kind() -> str:
    try:
        return jax.devices()[0].device_kind.lower()
    except Exception:
        return ""


def _gram_kernel(x_ref, g_ref):
    """G[core] += x_tile^T @ x_tile  (lane-dense (N, N) f32 accumulator, one slab per core)."""
    @pl.when(pl.program_id(1) == 0)
    def _init():
        g_ref[...] = jnp.zeros_like(g_ref)

    x = x_ref[...]                                                    # (TM, N)
    g_ref[0] += lax.dot_general(x, x, (((0,), (0,)), ((), ())),
                                preferred_element_type=jnp.float32)   # (N, N)


def _coeffs_kernel(x_ref, phip_ref, a_ref):
    """A[core] += (x_tile @ phi^+)^T @ x_tile  (v5e/f32 path, ~8 FLOP/byte, stays mem-bound)."""
    @pl.when(pl.program_id(1) == 0)
    def _init():
        a_ref[...] = jnp.zeros_like(a_ref)

    x = x_ref[...]                                                            # (TM, N)
    coeffs = jnp.dot(x, phip_ref[...], preferred_element_type=jnp.float32)    # (TM, K)
    a_ref[0] += lax.dot_general(coeffs.astype(x.dtype), x, (((0,), (0,)), ((), ())),
                                preferred_element_type=jnp.float32)           # (K, N)


def vp_iteration_layer(x, params, weight, *, tm=TM_DEFAULT):
    """Forward of VPIterationLayer: params - weight * VPIteration(x, params, fun_system)."""
    phi, dphi = fun_system(params)
    # TODO(synk): torch.linalg.pinv has no Pallas equivalent; small (K,N) pinv stays in JAX glue.
    phip = jnp.linalg.pinv(phi)                       # (N, K), f32

    n = x.shape[-1]
    m = int(np.prod(x.shape[:-1]))
    k = phi.shape[0]
    x2 = x.reshape(m, n)
    itemsize = x2.dtype.itemsize
    sub = {4: 8, 2: 16, 1: 32}.get(itemsize, 8)       # dtype-aware min sublane multiple

    kind = _device_kind()
    is_v5 = "v5" in kind
    is_v7 = ("v7" in kind) or ("tpu7" in kind)
    cores = 2 if is_v7 else 1                         # v7x: split the stream over both TCs
    use_coeffs = is_v5 and x2.dtype == jnp.float32    # keep f32 MXU off the crit path on v5e

    # --- Tiling: never pad/copy x. ---
    if m <= tm:
        tm_eff, steps, cores_eff = m, 1, 1            # one full-array block (always legal)
    else:
        tm_eff = max((tm // sub) * sub, sub)
        n_full = m // tm_eff
        cores_eff = min(cores, n_full)
        steps = n_full // cores_eff
    m_main = cores_eff * steps * tm_eff
    m_tail = m - m_main                               # ragged tail folded in by the epilogue

    x_index = lambda c, i: (c * steps + i, 0)
    if is_v7:
        x_spec = pl.BlockSpec((tm_eff, n), x_index, pipeline_mode=pl.Buffered(3))
    else:
        x_spec = pl.BlockSpec((tm_eff, n), x_index)

    if use_coeffs:
        kernel = _coeffs_kernel
        in_specs = [x_spec, pl.BlockSpec((n, k), lambda c, i: (0, 0))]   # phi^+ resident
        operands = (x2, phip.astype(x2.dtype))
        out_rows = k
        flops = 4 * m_main * n * k
    else:
        kernel = _gram_kernel
        in_specs = [x_spec]
        operands = (x2,)
        out_rows = n
        flops = 2 * m_main * n * n

    cost = pl.CostEstimate(
        flops=int(flops), transcendentals=0,
        bytes_accessed=int(m_main * n * itemsize + cores_eff * out_rows * n * 4))

    partials = pl.pallas_call(
        kernel,
        out_shape=jax.ShapeDtypeStruct((cores_eff, out_rows, n), jnp.float32),
        grid_spec=pltpu.PrefetchScalarGridSpec(
            num_scalar_prefetch=0,
            grid=(cores_eff, steps),
            in_specs=in_specs,
            out_specs=pl.BlockSpec((1, out_rows, n), lambda c, i: (c, 0, 0)),
        ),
        compiler_params=pltpu.CompilerParams(
            dimension_semantics=("parallel", "arbitrary")),
        cost_estimate=cost,
    )(*operands)

    # --- Tiny epilogue in plain JAX ---
    phi_f = phi.astype(jnp.float32)
    phip_f = phip.astype(jnp.float32)
    acc = partials.sum(axis=0)                                           # sum per-core partials

    if use_coeffs:
        a_mat = acc                                                      # (K, N) = coeffs^T x
        if m_tail:
            x_t = x2[m_main:].astype(jnp.float32)
            a_mat = a_mat + (x_t @ phip_f).T @ x_t
    else:
        g_mat = acc                                                      # (N, N) = x^T x
        if m_tail:
            x_t = x2[m_main:].astype(jnp.float32)
            g_mat = g_mat + x_t.T @ x_t
        a_mat = phip_f.T @ g_mat                                         # (K, N) = coeffs^T x

    b_mat = a_mat @ phip_f                                               # (K, K) = coeffs^T coeffs
    c_mat = a_mat - b_mat @ phi_f                                        # (K, N) = coeffs^T res
    g = jnp.einsum('pkn,kn->p', dphi.astype(jnp.float32), c_mat)         # (P,)
    step = (-2.0 / float(m)) * g                                         # VPIteration output
    out = params.astype(jnp.float32) - jnp.asarray(weight, jnp.float32) * step
    return out.astype(params.dtype)


def reference(x, params, weight):
    """Pure-JAX re-implementation of the PyTorch forward for validation."""
    phi, dphi = fun_system(params)
    phip = jnp.linalg.pinv(phi)
    coeffs = x @ phip
    x_hat = coeffs @ phi
    res = x - x_hat
    jac = jnp.einsum('...k,pkn->p...n', coeffs, dphi)      # bbmm(coeffs, dphi)
    g = (jac * res[None]).sum(-1)                          # (P, batch, *)
    step = -2.0 * g.reshape(g.shape[0], -1).mean(-1)       # VPIteration
    return params - weight * step


if __name__ == "__main__":
    key = jax.random.PRNGKey(0)
    params = jnp.array([1.3, 0.2], dtype=jnp.float32)      # nonlinear system params (P,)
    weight = jnp.array(0.5, dtype=jnp.float32)             # weight_init, size ()

    # Small shape: single full-array block path.
    x_small = jax.random.normal(key, (2, 8, NUM_SAMPLES), dtype=jnp.float32)
    out = jax.block_until_ready(vp_iteration_layer(x_small, params, weight))
    ref = jax.block_until_ready(reference(x_small, params, weight))
    np.testing.assert_allclose(np.asarray(out), np.asarray(ref), rtol=1e-3, atol=1e-3)

    # Multi-tile path with a ragged tail (tm forced small to exercise it at tiny sizes).
    x_big = jax.random.normal(jax.random.PRNGKey(1), (40, 3, NUM_SAMPLES), dtype=jnp.float32)
    out2 = jax.block_until_ready(vp_iteration_layer(x_big, params, weight, tm=32))
    ref2 = jax.block_until_ready(reference(x_big, params, weight))
    np.testing.assert_allclose(np.asarray(out2), np.asarray(ref2), rtol=1e-3, atol=1e-3)

    print("KERNEL_OK")
</pallas_src>

<mosaic_0001>
module attributes {stable_mosaic.version = 11 : i64} {
  func.func @_gram_kernel(%arg0: i32, %arg1: i32, %arg2: memref<16x128xf32, #tpu.memory_space<vmem>>, %arg3: memref<1x128x128xf32, #tpu.memory_space<vmem>>) attributes {dimension_semantics = [#tpu.dimension_semantics<parallel>, #tpu.dimension_semantics<arbitrary>], iteration_bounds = array<i64: 1, 1>, scalar_prefetch = 0 : i64, scratch_operands = 0 : i64, tpu.core_type = #tpu.core_type<tc>, window_params = [{transform_indices = @transform_0, window_bounds = array<i64: 16, 128>}, {transform_indices = @transform_1, window_bounds = array<i64: 1, 128, 128>}]} {
    %c0_i32 = arith.constant 0 : i32
    %0 = arith.cmpi eq, %arg1, %c0_i32 : i32
    %1 = arith.extui %0 : i1 to i32
    %c0_i32_0 = arith.constant 0 : i32
    %2 = arith.cmpi ne, %1, %c0_i32_0 : i32
    scf.if %2 {
      %cst_8 = arith.constant 0.000000e+00 : f32
      %11 = vector.broadcast %cst_8 : f32 to vector<1x128x128xf32>
      %c0_9 = arith.constant 0 : index
      %c0_10 = arith.constant 0 : index
      %c0_11 = arith.constant 0 : index
      %12 = vector.load %arg3[%c0_9, %c0_10, %c0_11] : memref<1x128x128xf32, #tpu.memory_space<vmem>>, vector<1x128x128xf32>
      tpu.vector_store %arg3[%c0_9, %c0_10, %c0_11], %11 {strides = array<i32>} : memref<1x128x128xf32, #tpu.memory_space<vmem>>, vector<1x128x128xf32>,
    } else {
    }
    %c0 = arith.constant 0 : index
    %c0_1 = arith.constant 0 : index
    %3 = vector.load %arg2[%c0, %c0_1] : memref<16x128xf32, #tpu.memory_space<vmem>>, vector<16x128xf32>
    %c0_2 = arith.constant 0 : index
    %c0_3 = arith.constant 0 : index
    %c0_4 = arith.constant 0 : index
    %4 = vector.load %arg3[%c0_2, %c0_3, %c0_4] : memref<1x128x128xf32, #tpu.memory_space<vmem>>, vector<1x128x128xf32>
    %5 = vector.shape_cast %4 : vector<1x128x128xf32> to vector<128x128xf32>
    %cst = arith.constant dense<0.000000e+00> : vector<128x128xf32>
    %6 = tpu.matmul %3, %3, %cst {dimension_numbers = #tpu.dot_dimension_numbers<[0], [0], [1], [1], [0, 1, 1, 1], [], []>} : vector<16x128xf32>, vector<16x128xf32>, vector<128x128xf32> -> vector<128x128xf32>
    %7 = arith.addf %5, %6 : vector<128x128xf32>
    %c0_5 = arith.constant 0 : index
    %c0_6 = arith.constant 0 : index
    %c0_7 = arith.constant 0 : index
    %8 = vector.load %arg3[%c0_5, %c0_6, %c0_7] : memref<1x128x128xf32, #tpu.memory_space<vmem>>, vector<1x128x128xf32>
    %9 = vector.shape_cast %8 : vector<1x128x128xf32> to vector<128x128xf32>
    %10 = vector.shape_cast %7 : vector<128x128xf32> to vector<1x128x128xf32>
    tpu.vector_store %arg3[%c0_5, %c0_6, %c0_7], %10 {strides = array<i32>} : memref<1x128x128xf32, #tpu.memory_space<vmem>>, vector<1x128x128xf32>,
    return
  }
  func.func @transform_0(%arg0: i32, %arg1: i32) -> (i32, i32) {
    %c1_i32 = arith.constant 1 : i32
    %0 = arith.muli %arg0, %c1_i32 : i32
    %1 = arith.addi %0, %arg1 : i32
    %c0_i32 = arith.constant 0 : i32
    %c0_i32_0 = arith.constant 0 : i32
    return %1, %c0_i32 : i32, i32
  }
  func.func @transform_1(%arg0: i32, %arg1: i32) -> (i32, i32, i32) {
    %c0_i32 = arith.constant 0 : i32
    %c0_i32_0 = arith.constant 0 : i32
    %c0_i32_1 = arith.constant 0 : i32
    return %arg0, %c0_i32, %c0_i32_0 : i32, i32, i32
  }
}

</mosaic_0001>

<llo_original>
// kernel: tpu_custom_call.1
$region0: #{tpu_custom_call.1}
  #allocation0 [shape = 'u32[]', space=smem, size = 0x4, offset = 0x4, fixed_abs, tag = 'smem constant byte address 0x4 - core index']
  #allocation1 [shape = 'u32[144,128]{1,0:T(1,128)}', space=vmem, size = 0x12000, scoped, tag = 'internal scratch']
  %s0 = inlined_call_operand.hbm [shape: f32[16,128], index: 0, kind: input, shape index: {}]
  %s1 = inlined_call_operand.hbm [shape: f32[1,128,128], index: 1, kind: output, shape index: {}]
  %s2 = sld [smem:[#allocation0]]
  $region22: #{tpu_custom_call.1} parent=0
    _
  %s4 = ssub.s32 1, %s2
  %s5 = scalar_select 0, %s4, %s2
  $region1: #{tpu_custom_call.1} parent=0
    #allocation2 [shape = 'u8[8192]{0}', space=vmem, size = 0x2000, scoped, tag = 'input window, operand 0, single buffered']
    #allocation3 [shape = 's32[1]{0}', space=sflag, size = 0x4, scoped, tag = 'scoped memory for tpu_custom_call.1']
    #allocation4 [shape = 's32[1]{0}', space=sflag, size = 0x4, scoped, tag = 'scoped memory for tpu_custom_call.1']
    #allocation5 [shape = 'u8[65536]{0}', space=vmem, size = 0x10000, scoped, tag = 'output window, operand 0, single buffered']
    %6 = vsyncpa [#allocation3], 0
    %7 = vsyncpa [#allocation4], 0
    // Predicated region
    $region2: #{tpu_custom_call.1} parent=1 // pred_check
      _
    $region3: #{tpu_custom_call.1} parent=1 // pred_check_branch
      %9 = sbr.rel (0) target = $region5
    $region4: #{tpu_custom_call.1} parent=1 // pred_region
      %s10 = sadd.s32 0, 0
      %s11 = smul.u32 2, %s10
      %s13 = ssub.s32 256, 256
      %14 = vsyncadd [#allocation3], %s13
      %s15 = smul.addr %s11, 128
      %s16 = scalar_lea.hbm %s0, %s15
      %s17 = sshll.u32 [#allocation2], 4
      %s18 = int_to_ptr.vmem [resolvable:$true] %s17
      %23 = dma.hbm_to_vmem [thread:$0]  %s16, 256, %s18, [#allocation3], 128, 128, 8
    $region5: #{tpu_custom_call.1} parent=1 // pred_fallthru
      _
    // Predicated region
    $region6: #{tpu_custom_call.1} parent=1 // pred_check
      _
    $region7: #{tpu_custom_call.1} parent=1 // pred_check_branch
      %25 = sbr.rel (0) target = $region9
    $region8: #{tpu_custom_call.1} parent=1 // pred_region
      %26 = dma.done [#allocation3], 256
    $region9: #{tpu_custom_call.1} parent=1 // pred_fallthru
      _
    %s27 = sadd.s32 0, 0
    %s28 = smul.u32 2, %s27
    %p29 = scmp.eq.s32.totalorder 0, 0
    // Predicated region
    $region10: #{tpu_custom_call.1} parent=1 // pred_check
      %p30 = pneg %p29
    $region11: #{tpu_custom_call.1} parent=1 // pred_check_branch
      %32 = sbr.rel (%p30) target = $region13
    $region12: #{tpu_custom_call.1} parent=1 // pred_region
      %33 = vst [vmem:[#allocation5] sm:$0xff] 0.0
      %34 = vst [vmem:[#allocation5 + $0x8] sm:$0xff] 0.0
      %35 = vst [vmem:[#allocation5 + $0x10] sm:$0xff] 0.0
      %36 = vst [vmem:[#allocation5 + $0x18] sm:$0xff] 0.0
      %37 = vst [vmem:[#allocation5 + $0x20] sm:$0xff] 0.0
      %38 = vst [vmem:[#allocation5 + $0x28] sm:$0xff] 0.0
      %39 = vst [vmem:[#allocation5 + $0x30] sm:$0xff] 0.0
      %40 = vst [vmem:[#allocation5 + $0x38] sm:$0xff] 0.0
      %41 = vst [vmem:[#allocation5 + $0x40] sm:$0xff] 0.0
      %42 = vst [vmem:[#allocation5 + $0x48] sm:$0xff] 0.0
      %43 = vst [vmem:[#allocation5 + $0x50] sm:$0xff] 0.0
      %44 = vst [vmem:[#allocation5 + $0x58] sm:$0xff] 0.0
      %45 = vst [vmem:[#allocation5 + $0x60] sm:$0xff] 0.0
      %46 = vst [vmem:[#allocation5 + $0x68] sm:$0xff] 0.0
      %47 = vst [vmem:[#allocation5 + $0x70] sm:$0xff] 0.0
      %48 = vst [vmem:[#allocation5 + $0x78] sm:$0xff] 0.0
    $region13: #{tpu_custom_call.1} parent=1 // pred_fallthru
      _
    %v49 = vld [vmem:[#allocation2] sm:$0xff]
    %v50 = vld [vmem:[#allocation2 + $0x8] sm:$0xff]
    %v51 = vld [vmem:[#allocation5] sm:$0xff]
    %v52 = vld [vmem:[#allocation5 + $0x8] sm:$0xff]
    %v53 = vld [vmem:[#allocation5 + $0x10] sm:$0xff]
    %v54 = vld [vmem:[#allocation5 + $0x18] sm:$0xff]
    %v55 = vld [vmem:[#allocation5 + $0x20] sm:$0xff]
    %v56 = vld [vmem:[#allocation5 + $0x28] sm:$0xff]
    %v57 = vld [vmem:[#allocation5 + $0x30] sm:$0xff]
    %v58 = vld [vmem:[#allocation5 + $0x38] sm:$0xff]
    %v59 = vld [vmem:[#allocation5 + $0x40] sm:$0xff]
    %v60 = vld [vmem:[#allocation5 + $0x48] sm:$0xff]
    %v61 = vld [vmem:[#allocation5 + $0x50] sm:$0xff]
    %v62 = vld [vmem:[#allocation5 + $0x58] sm:$0xff]
    %v63 = vld [vmem:[#allocation5 + $0x60] sm:$0xff]
    %v64 = vld [vmem:[#allocation5 + $0x68] sm:$0xff]
    %v65 = vld [vmem:[#allocation5 + $0x70] sm:$0xff]
    %v66 = vld [vmem:[#allocation5 + $0x78] sm:$0xff]
    %67 = vxpose.xlu0.b32.start [1/16] %v49, 128
    %68 = vxpose.xlu0.b32.cont [2/16] %v50, 128
    %69 = vxpose.xlu0.b32.cont [3/16] 0.0, 128
    %70 = vxpose.xlu0.b32.cont [4/16] 0.0, 128
    %71 = vxpose.xlu0.b32.cont [5/16] 0.0, 128
    %72 = vxpose.xlu0.b32.cont [6/16] 0.0, 128
    %73 = vxpose.xlu0.b32.cont [7/16] 0.0, 128
    %74 = vxpose.xlu0.b32.cont [8/16] 0.0, 128
    %75 = vxpose.xlu0.b32.cont [9/16] 0.0, 128
    %76 = vxpose.xlu0.b32.cont [10/16] 0.0, 128
    %77 = vxpose.xlu0.b32.cont [11/16] 0.0, 128
    %78 = vxpose.xlu0.b32.cont [12/16] 0.0, 128
    %79 = vxpose.xlu0.b32.cont [13/16] 0.0, 128
    %80 = vxpose.xlu0.b32.cont [14/16] 0.0, 128
    %81 = vxpose.xlu0.b32.cont [15/16] 0.0, 128
    %82 = vxpose.xlu0.b32.end [16/16] 0.0, 128
    %v83 = vpop.trf.xlu0
    %v84 = vpop.trf.xlu0
    %v85 = vpop.trf.xlu0
    %v86 = vpop.trf.xlu0
    %v87 = vpop.trf.xlu0
    %v88 = vpop.trf.xlu0
    %v89 = vpop.trf.xlu0
    %v90 = vpop.trf.xlu0
    %v91 = vpop.trf.xlu0
    %v92 = vpop.trf.xlu0
    %v93 = vpop.trf.xlu0
    %v94 = vpop.trf.xlu0
    %v95 = vpop.trf.xlu0
    %v96 = vpop.trf.xlu0
    %v97 = vpop.trf.xlu0
    %v98 = vpop.trf.xlu0
    %vm99 = vcmask 130048
    %v101 = vsel %vm99, %v83, 0
    %v104 = vsel %vm99, %v84, 0
    %v107 = vsel %vm99, %v85, 0
    %v110 = vsel %vm99, %v86, 0
    %v113 = vsel %vm99, %v87, 0
    %v116 = vsel %vm99, %v88, 0
    %v119 = vsel %vm99, %v89, 0
    %v122 = vsel %vm99, %v90, 0
    %v125 = vsel %vm99, %v91, 0
    %v128 = vsel %vm99, %v92, 0
    %v131 = vsel %vm99, %v93, 0
    %v134 = vsel %vm99, %v94, 0
    %v137 = vsel %vm99, %v95, 0
    %v140 = vsel %vm99, %v96, 0
    %v143 = vsel %vm99, %v97, 0
    %v146 = vsel %vm99, %v98, 0
    %148 = vmatprep.subr.mxu0 0.0
    %149 = vmatpush1.msra.mxu0 0.0
    %150 = vmatprep.subr.mxu0 0.0
    %151 = vmatpush1.msra.mxu0 0.0
    %152 = vmatprep.subr.mxu0 0.0
    %153 = vmatpush1.msra.mxu0 0.0
    %154 = vmatprep.subr.mxu0 0.0
    %155 = vmatpush1.msra.mxu0 0.0
    %156 = vmatprep.subr.mxu0 0.0
    %157 = vmatpush1.msra.mxu0 0.0
    %158 = vmatprep.subr.mxu0 0.0
    %159 = vmatpush1.msra.mxu0 0.0
    %160 = vmatprep.subr.mxu0 0.0
    %161 = vmatpush1.msra.mxu0 0.0
    %162 = vmatprep.subr.mxu0 0.0
    %163 = vmatpush1.msra.mxu0 0.0
    %164 = vmatprep.subr.mxu0 0.0
    %165 = vmatpush1.msra.mxu0 0.0
    %166 = vmatprep.subr.mxu0 0.0
    %167 = vmatpush1.msra.mxu0 0.0
    %168 = vmatprep.subr.mxu0 0.0
    %169 = vmatpush1.msra.mxu0 0.0
    %170 = vmatprep.subr.mxu0 0.0
    %171 = vmatpush1.msra.mxu0 0.0
    %172 = vmatprep.subr.mxu0 0.0
    %173 = vmatpush1.msra.mxu0 0.0
    %174 = vmatprep.subr.mxu0 0.0
    %175 = vmatpush1.msra.mxu0 0.0
    %176 = vmatprep.subr.mxu0 0.0
    %177 = vmatpush1.msra.mxu0 %v50
    %178 = vmatprep.subr.mxu0 0.0
    %179 = vmatpush1.msra.mxu0 %v49
    %180 = vmatprep.subr.mxu0 0.0
    %181 = vmatpush2.msra.mxu0 0.0
    %182 = vmatprep.subr.mxu0 0.0
    %183 = vmatpush2.msra.mxu0 0.0
    %184 = vmatprep.subr.mxu0 0.0
    %185 = vmatpush2.msra.mxu0 0.0
    %186 = vmatprep.subr.mxu0 0.0
    %187 = vmatpush2.msra.mxu0 0.0
    %188 = vmatprep.subr.mxu0 0.0
    %189 = vmatpush2.msra.mxu0 0.0
    %190 = vmatprep.subr.mxu0 0.0
    %191 = vmatpush2.msra.mxu0 0.0
    %192 = vmatprep.subr.mxu0 0.0
    %193 = vmatpush2.msra.mxu0 0.0
    %194 = vmatprep.subr.mxu0 0.0
    %195 = vmatpush2.msra.mxu0 0.0
    %196 = vmatprep.subr.mxu0 0.0
    %197 = vmatpush2.msra.mxu0 0.0
    %198 = vmatprep.subr.mxu0 0.0
    %199 = vmatpush2.msra.mxu0 0.0
    %200 = vmatprep.subr.mxu0 0.0
    %201 = vmatpush2.msra.mxu0 0.0
    %202 = vmatprep.subr.mxu0 0.0
    %203 = vmatpush2.msra.mxu0 0.0
    %204 = vmatprep.subr.mxu0 0.0
    %205 = vmatpush2.msra.mxu0 0.0
    %206 = vmatprep.subr.mxu0 0.0
    %207 = vmatpush2.msra.mxu0 0.0
    %208 = vmatprep.subr.mxu0 0.0
    %209 = vmatpush2.msra.mxu0 0.0
    %210 = vmatprep.subr.mxu0 0.0
    %211 = vmatpush2.msra.mxu0 0.0
    %212 = vmatprep.mubr.f32.mxu0 0.0
    %213 = vmatmul.mubr.f32.gmra.mxu0 %v101
    %v214 = vpop.f32.mrf.mxu0
    %v215 = vadd.f32 0.0, %v214
    %v216 = vpop.f32.mrf.mxu0
    %217 = vmatprep.mubr.f32.mxu0 0.0
    %218 = vmatmul.mubr.f32.gmra.mxu0 %v104
    %v219 = vpop.f32.mrf.mxu0
    %v220 = vadd.f32 0.0, %v219
    %v221 = vpop.f32.mrf.mxu0
    %222 = vmatprep.mubr.f32.mxu0 0.0
    %223 = vmatmul.mubr.f32.gmra.mxu0 %v107
    %v224 = vpop.f32.mrf.mxu0
    %v225 = vadd.f32 0.0, %v224
    %v226 = vpop.f32.mrf.mxu0
    %227 = vmatprep.mubr.f32.mxu0 0.0
    %228 = vmatmul.mubr.f32.gmra.mxu0 %v110
    %v229 = vpop.f32.mrf.mxu0
    %v230 = vadd.f32 0.0, %v229
    %v231 = vpop.f32.mrf.mxu0
    %232 = vmatprep.mubr.f32.mxu0 0.0
    %233 = vmatmul.mubr.f32.gmra.mxu0 %v113
    %v234 = vpop.f32.mrf.mxu0
    %v235 = vadd.f32 0.0, %v234
    %v236 = vpop.f32.mrf.mxu0
    %237 = vmatprep.mubr.f32.mxu0 0.0
    %238 = vmatmul.mubr.f32.gmra.mxu0 %v116
    %v239 = vpop.f32.mrf.mxu0
    %v240 = vadd.f32 0.0, %v239
    %v241 = vpop.f32.mrf.mxu0
    %242 = vmatprep.mubr.f32.mxu0 0.0
    %243 = vmatmul.mubr.f32.gmra.mxu0 %v119
    %v244 = vpop.f32.mrf.mxu0
    %v245 = vadd.f32 0.0, %v244
    %v246 = vpop.f32.mrf.mxu0
    %247 = vmatprep.mubr.f32.mxu0 0.0
    %248 = vmatmul.mubr.f32.gmra.mxu0 %v122
    %v249 = vpop.f32.mrf.mxu0
    %v250 = vadd.f32 0.0, %v249
    %v251 = vpop.f32.mrf.mxu0
    %252 = vmatprep.mubr.f32.mxu0 0.0
    %253 = vmatmul.mubr.f32.gmra.mxu0 %v125
    %v254 = vpop.f32.mrf.mxu0
    %v255 = vadd.f32 0.0, %v254
    %v256 = vpop.f32.mrf.mxu0
    %257 = vmatprep.mubr.f32.mxu0 0.0
    %258 = vmatmul.mubr.f32.gmra.mxu0 %v128
    %v259 = vpop.f32.mrf.mxu0
    %v260 = vadd.f32 0.0, %v259
    %v261 = vpop.f32.mrf.mxu0
    %262 = vmatprep.mubr.f32.mxu0 0.0
    %263 = vmatmul.mubr.f32.gmra.mxu0 %v131
    %v264 = vpop.f32.mrf.mxu0
    %v265 = vadd.f32 0.0, %v264
    %v266 = vpop.f32.mrf.mxu0
    %267 = vmatprep.mubr.f32.mxu0 0.0
    %268 = vmatmul.mubr.f32.gmra.mxu0 %v134
    %v269 = vpop.f32.mrf.mxu0
    %v270 = vadd.f32 0.0, %v269
    %v271 = vpop.f32.mrf.mxu0
    %272 = vmatprep.mubr.f32.mxu0 0.0
    %273 = vmatmul.mubr.f32.gmra.mxu0 %v137
    %v274 = vpop.f32.mrf.mxu0
    %v275 = vadd.f32 0.0, %v274
    %v276 = vpop.f32.mrf.mxu0
    %277 = vmatprep.mubr.f32.mxu0 0.0
    %278 = vmatmul.mubr.f32.gmra.mxu0 %v140
    %v279 = vpop.f32.mrf.mxu0
    %v280 = vadd.f32 0.0, %v279
    %v281 = vpop.f32.mrf.mxu0
    %282 = vmatprep.mubr.f32.mxu0 0.0
    %283 = vmatmul.mubr.f32.gmra.mxu0 %v143
    %v284 = vpop.f32.mrf.mxu0
    %v285 = vadd.f32 0.0, %v284
    %v286 = vpop.f32.mrf.mxu0
    %287 = vmatprep.mubr.f32.mxu0 0.0
    %288 = vmatmul.mubr.f32.gmra.mxu0 %v146
    %v289 = vpop.f32.mrf.mxu0
    %v290 = vadd.f32 0.0, %v289
    %v291 = vpop.f32.mrf.mxu0
    %292 = vdwg.mxu0
    %v293 = vadd.f32 %v51, %v215
    %v294 = vadd.f32 %v52, %v220
    %v295 = vadd.f32 %v53, %v225
    %v296 = vadd.f32 %v54, %v230
    %v297 = vadd.f32 %v55, %v235
    %v298 = vadd.f32 %v56, %v240
    %v299 = vadd.f32 %v57, %v245
    %v300 = vadd.f32 %v58, %v250
    %v301 = vadd.f32 %v59, %v255
    %v302 = vadd.f32 %v60, %v260
    %v303 = vadd.f32 %v61, %v265
    %v304 = vadd.f32 %v62, %v270
    %v305 = vadd.f32 %v63, %v275
    %v306 = vadd.f32 %v64, %v280
    %v307 = vadd.f32 %v65, %v285
    %v308 = vadd.f32 %v66, %v290
    %309 = vst [vmem:[#allocation5] sm:$0xff] %v293
    %310 = vst [vmem:[#allocation5 + $0x8] sm:$0xff] %v294
    %311 = vst [vmem:[#allocation5 + $0x10] sm:$0xff] %v295
    %312 = vst [vmem:[#allocation5 + $0x18] sm:$0xff] %v296
    %313 = vst [vmem:[#allocation5 + $0x20] sm:$0xff] %v297
    %314 = vst [vmem:[#allocation5 + $0x28] sm:$0xff] %v298
    %315 = vst [vmem:[#allocation5 + $0x30] sm:$0xff] %v299
    %316 = vst [vmem:[#allocation5 + $0x38] sm:$0xff] %v300
    %317 = vst [vmem:[#allocation5 + $0x40] sm:$0xff] %v301
    %318 = vst [vmem:[#allocation5 + $0x48] sm:$0xff] %v302
    %319 = vst [vmem:[#allocation5 + $0x50] sm:$0xff] %v303
    %320 = vst [vmem:[#allocation5 + $0x58] sm:$0xff] %v304
    %321 = vst [vmem:[#allocation5 + $0x60] sm:$0xff] %v305
    %322 = vst [vmem:[#allocation5 + $0x68] sm:$0xff] %v306
    %323 = vst [vmem:[#allocation5 + $0x70] sm:$0xff] %v307
    %324 = vst [vmem:[#allocation5 + $0x78] sm:$0xff] %v308
    // Predicated region
    $region14: #{tpu_custom_call.1} parent=1 // pred_check
      _
    $region15: #{tpu_custom_call.1} parent=1 // pred_check_branch
      %326 = sbr.rel (0) target = $region17
    $region16: #{tpu_custom_call.1} parent=1 // pred_region
      %s328 = ssub.s32 2048, 2048
      %329 = vsyncadd [#allocation4], %s328
      %s330 = sshll.u32 [#allocation5], 4
      %s331 = int_to_ptr.vmem [resolvable:$true] %s330
      %336 = dma.vmem_to_hbm [thread:$0]  %s331, 2048, %s1, [#allocation4], 128, 128, 8
    $region17: #{tpu_custom_call.1} parent=1 // pred_fallthru
      _
    // Predicated region
    $region18: #{tpu_custom_call.1} parent=1 // pred_check
      _
    $region19: #{tpu_custom_call.1} parent=1 // pred_check_branch
      %338 = sbr.rel (0) target = $region21
    $region20: #{tpu_custom_call.1} parent=1 // pred_region
      %339 = dma.done [#allocation4], 2048
    $region21: #{tpu_custom_call.1} parent=1 // pred_fallthru
      _
    %340 = vsyncpa [#allocation3], 1
    %341 = vsyncpa [#allocation4], 1

</llo_original>
